<compile_context>
chip_gen: v5e
topology: v5e:2x2
jax: 0.10.0
libtpu: 0.0.40
codegen_flags: <defaults>
</compile_context>

<pallas_src>
import functools

import jax
import jax.numpy as jnp
from jax import lax
from jax.experimental import pallas as pl
from jax.experimental.pallas import tpu as pltpu

LANES = 128
SUBLANES = 8
ALIGN_ROWS = 16                        # bf16-safe sublane alignment (covers f32's 8)
ALIGN = ALIGN_ROWS * LANES             # 2048-element padding unit
MAX_BLOCK_ROWS = 4096                  # 4096 x 128 f32 = 2 MiB per input block


def _bce_blur_kernel(pred_ref, true_ref, out_ref, *,
                     alpha, block_rows, nb_inner, nb_total, tail_valid, has_clamp):
    c = pl.program_id(0)               # megacore split axis ("parallel")
    i = pl.program_id(1)               # reduction axis ("arbitrary", innermost)
    gb = c * nb_inner + i              # logical (unclamped) block index

    @pl.when(i == 0)
    def _init():
        out_ref[...] = jnp.zeros_like(out_ref)

    x = pred_ref[...].astype(jnp.float32)
    y = true_ref[...].astype(jnp.float32)

    # Shared transcendental: e = exp(-|x|) feeds both the stable-BCE softplus term
    # and the sigmoid (one fewer EUP exp per element than a separate sigmoid call).
    e = jnp.exp(-jnp.abs(x))
    # Numerically-stable BCEWithLogits (reduction='none'):
    #   max(x, 0) - x*y + log(1 + exp(-|x|))
    loss = jnp.maximum(x, 0.0) - x * y + jnp.log1p(e)
    # sigmoid(x) = where(x >= 0, 1, e) / (1 + e); divide expressed as reciprocal.
    # approx=False on purpose: af = 1 - exp((dx-1)*~20) amplifies error in p ~20x.
    p = jnp.where(x >= 0.0, 1.0, e) * pl.reciprocal(1.0 + e, approx=False)
    dx = p - y
    inv_alpha = 1.0 / (alpha + 0.0001)               # folded constant multiply
    alpha_factor = 1.0 - jnp.exp((dx - 1.0) * inv_alpha)
    vals = loss * alpha_factor

    def _fold(v):
        # Lane/sublane-preserving fold (block_rows, 128) -> (8, 128): pure VPU adds.
        return v.reshape(block_rows // SUBLANES, SUBLANES, LANES).sum(axis=0)

    block_elems = block_rows * LANES
    partial_tail = tail_valid < block_elems

    if not (partial_tail or has_clamp):
        # Hot path: every block is fully valid -> no masking anywhere.
        out_ref[0] += _fold(vals)
    else:
        @pl.when(gb < nb_total - 1)
        def _full():
            out_ref[0] += _fold(vals)

        @pl.when(gb == nb_total - 1)
        def _tail():
            if partial_tail:
                # Block-local mask; tail_valid is a compile-time constant, so no
                # global-offset int32 arithmetic (no overflow even for huge n).
                row = lax.broadcasted_iota(jnp.int32, (block_rows, LANES), 0)
                col = lax.broadcasted_iota(jnp.int32, (block_rows, LANES), 1)
                rel = row * LANES + col
                out_ref[0] += _fold(jnp.where(rel < tail_valid, vals, 0.0))
            else:
                out_ref[0] += _fold(vals)
        # gb > nb_total - 1 (clamped duplicate block past the end): contributes nothing.


def _tensorcores_per_device():
    """Best-effort TCs-per-device probe; a wrong guess only affects perf, never results."""
    try:
        kind = jax.devices()[0].device_kind.lower()
    except Exception:
        return 1
    if "v4" in kind or "v7" in kind:
        return 2                                    # v4 megacore, v7x: 2 TCs
    if "v5" in kind and "lite" not in kind and "v5e" not in kind:
        return 2                                    # v5p megacore
    return 1                                        # v5e / v6e: single TC


def bce_blur_with_logits_loss(pred, true, alpha=0.05):
    """Scalar mean of blurred BCE-with-logits loss, computed in a Pallas TPU kernel."""
    assert pred.shape == true.shape
    n = pred.size

    pred_f = pred.reshape(-1)
    true_f = true.reshape(-1)

    # Pad to a 16x128-aligned element count (legal minimum tile for f32 *and* bf16);
    # padded elements never contribute because the tail block is masked in-kernel.
    pad = (-n) % ALIGN
    if pad:
        pred_f = jnp.pad(pred_f, (0, pad))
        true_f = jnp.pad(true_f, (0, pad))

    rows = (n + pad) // LANES                       # multiple of 16
    pred2 = pred_f.reshape(rows, LANES)
    true2 = true_f.reshape(rows, LANES)

    block_rows = min(MAX_BLOCK_ROWS, rows)          # multiple of 16 by construction
    block_elems = block_rows * LANES
    nb_total = -(-rows // block_rows)
    tail_valid = n - (nb_total - 1) * block_elems   # valid elems in last logical block

    # 2-way "parallel" split only where a second TensorCore exists (v4/v5p/v7x); on
    # single-TC v5e/v6e it would just waste a clamped duplicate block on odd counts.
    num_splits = 2 if (nb_total >= 2 and _tensorcores_per_device() >= 2) else 1
    nb_inner = -(-nb_total // num_splits)
    has_clamp = num_splits * nb_inner != nb_total

    if has_clamp:
        # Odd block count with 2 splits: clamp the trailing duplicate block; its
        # contribution is skipped in-kernel (gb > nb_total - 1).
        idx_map = lambda c, i: (jnp.minimum(c * nb_inner + i, nb_total - 1), 0)
    else:
        idx_map = lambda c, i: (c * nb_inner + i, 0)

    kernel = functools.partial(
        _bce_blur_kernel, alpha=alpha, block_rows=block_rows, nb_inner=nb_inner,
        nb_total=nb_total, tail_valid=tail_valid, has_clamp=has_clamp)

    # VMEM budget: 2 inputs x 2 pipeline buffers of one block, plus headroom; clamp to
    # [16 MiB, 32 MiB] which is safe on v5e/v6e (128 MiB phys) and v7x (64 MiB phys).
    in_block_bytes = block_rows * LANES * (pred2.dtype.itemsize + true2.dtype.itemsize)
    vmem_limit = int(min(max(2 * in_block_bytes + (4 << 20), 16 << 20), 32 << 20))

    partials = pl.pallas_call(
        kernel,
        out_shape=jax.ShapeDtypeStruct((num_splits, SUBLANES, LANES), jnp.float32),
        grid_spec=pltpu.PrefetchScalarGridSpec(
            num_scalar_prefetch=0,
            grid=(num_splits, nb_inner),
            in_specs=[
                pl.BlockSpec((block_rows, LANES), idx_map),
                pl.BlockSpec((block_rows, LANES), idx_map),
            ],
            # Same out-block index across the reduction axis -> VMEM-resident
            # accumulator; no separate scratch needed.
            out_specs=pl.BlockSpec((1, SUBLANES, LANES), lambda c, i: (c, 0, 0)),
        ),
        compiler_params=pltpu.CompilerParams(
            dimension_semantics=("parallel", "arbitrary"),
            vmem_limit_bytes=vmem_limit,
        ),
    )(pred2, true2)

    # Tiny (<= 2x8x128) final cross-lane reduce + mean in the wrapper.
    return (jnp.sum(partials) / jnp.float32(n)).astype(pred.dtype)


def _reference(pred, true, alpha=0.05):
    x = pred.astype(jnp.float32)
    y = true.astype(jnp.float32)
    loss = jnp.maximum(x, 0.0) - x * y + jnp.log1p(jnp.exp(-jnp.abs(x)))
    p = jax.nn.sigmoid(x)
    dx = p - y
    af = 1.0 - jnp.exp((dx - 1.0) / (alpha + 0.0001))
    return jnp.mean(loss * af)


if __name__ == "__main__":
    key = jax.random.PRNGKey(0)
    k1, k2 = jax.random.split(key)
    # NCHW, same convention as the PyTorch module's typical objectness inputs.
    pred = jax.random.normal(k1, (2, 4, 16, 16), dtype=jnp.float32)
    true = jax.random.bernoulli(k2, p=0.3, shape=(2, 4, 16, 16)).astype(jnp.float32)

    out = bce_blur_with_logits_loss(pred, true, alpha=0.05)
    out = jax.block_until_ready(out)

    ref = _reference(pred, true, alpha=0.05)
    assert jnp.allclose(out, ref, atol=1e-5, rtol=1e-5), (out, ref)
    print("KERNEL_OK")
</pallas_src>

<mosaic_0001>
module attributes {stable_mosaic.version = 11 : i64} {
  func.func @_bce_blur_kernel(%arg0: i32, %arg1: i32, %arg2: memref<16x128xf32, #tpu.memory_space<vmem>>, %arg3: memref<16x128xf32, #tpu.memory_space<vmem>>, %arg4: memref<1x8x128xf32, #tpu.memory_space<vmem>>) attributes {dimension_semantics = [#tpu.dimension_semantics<parallel>, #tpu.dimension_semantics<arbitrary>], iteration_bounds = array<i64: 1, 1>, scalar_prefetch = 0 : i64, scratch_operands = 0 : i64, tpu.core_type = #tpu.core_type<tc>, window_params = [{transform_indices = @transform_0, window_bounds = array<i64: 16, 128>}, {transform_indices = @transform_1, window_bounds = array<i64: 16, 128>}, {transform_indices = @transform_2, window_bounds = array<i64: 1, 8, 128>}]} {
    %c0_i32 = arith.constant 0 : i32
    %0 = arith.cmpi eq, %arg1, %c0_i32 : i32
    %1 = arith.extui %0 : i1 to i32
    %c0_i32_0 = arith.constant 0 : i32
    %2 = arith.cmpi ne, %1, %c0_i32_0 : i32
    scf.if %2 {
      %cst_18 = arith.constant 0.000000e+00 : f32
      %40 = vector.broadcast %cst_18 : f32 to vector<1x8x128xf32>
      %c0_19 = arith.constant 0 : index
      %c0_20 = arith.constant 0 : index
      %c0_21 = arith.constant 0 : index
      %41 = vector.load %arg4[%c0_19, %c0_20, %c0_21] : memref<1x8x128xf32, #tpu.memory_space<vmem>>, vector<1x8x128xf32>
      tpu.vector_store %arg4[%c0_19, %c0_20, %c0_21], %40 {strides = array<i32>} : memref<1x8x128xf32, #tpu.memory_space<vmem>>, vector<1x8x128xf32>,
    } else {
    }
    %c0 = arith.constant 0 : index
    %c0_1 = arith.constant 0 : index
    %3 = vector.load %arg2[%c0, %c0_1] : memref<16x128xf32, #tpu.memory_space<vmem>>, vector<16x128xf32>
    %c0_2 = arith.constant 0 : index
    %c0_3 = arith.constant 0 : index
    %4 = vector.load %arg3[%c0_2, %c0_3] : memref<16x128xf32, #tpu.memory_space<vmem>>, vector<16x128xf32>
    %5 = math.absf %3 : vector<16x128xf32>
    %cst = arith.constant 0.000000e+00 : f32
    %6 = vector.broadcast %cst : f32 to vector<16x128xf32>
    %7 = arith.subf %6, %5 : vector<16x128xf32>
    %8 = math.exp %7 : vector<16x128xf32>
    %cst_4 = arith.constant 0.000000e+00 : f32
    %9 = vector.broadcast %cst_4 : f32 to vector<16x128xf32>
    %10 = arith.maximumf %3, %9 : vector<16x128xf32>
    %11 = arith.mulf %3, %4 : vector<16x128xf32>
    %12 = arith.subf %10, %11 : vector<16x128xf32>
    %13 = math.log1p %8 : vector<16x128xf32>
    %14 = arith.addf %12, %13 : vector<16x128xf32>
    %cst_5 = arith.constant 0.000000e+00 : f32
    %15 = vector.broadcast %cst_5 : f32 to vector<16x128xf32>
    %16 = arith.cmpf oge, %3, %15 : vector<16x128xf32>
    %cst_6 = arith.constant 1.000000e+00 : f32
    %17 = vector.broadcast %cst_6 : f32 to vector<16x128xf32>
    %18 = arith.select %16, %17, %8 : vector<16x128xi1>, vector<16x128xf32>
    %cst_7 = arith.constant 1.000000e+00 : f32
    %19 = vector.broadcast %cst_7 : f32 to vector<16x128xf32>
    %20 = arith.addf %19, %8 : vector<16x128xf32>
    %21 = tpu.reciprocal %20 : vector<16x128xf32> -> vector<16x128xf32>
    %22 = arith.mulf %18, %21 : vector<16x128xf32>
    %23 = arith.subf %22, %4 : vector<16x128xf32>
    %cst_8 = arith.constant 1.000000e+00 : f32
    %24 = vector.broadcast %cst_8 : f32 to vector<16x128xf32>
    %25 = arith.subf %23, %24 : vector<16x128xf32>
    %cst_9 = arith.constant 19.9600792 : f32
    %26 = vector.broadcast %cst_9 : f32 to vector<16x128xf32>
    %27 = arith.mulf %25, %26 : vector<16x128xf32>
    %28 = math.exp %27 : vector<16x128xf32>
    %cst_10 = arith.constant 1.000000e+00 : f32
    %29 = vector.broadcast %cst_10 : f32 to vector<16x128xf32>
    %30 = arith.subf %29, %28 : vector<16x128xf32>
    %31 = arith.mulf %14, %30 : vector<16x128xf32>
    %c0_11 = arith.constant 0 : index
    %c0_12 = arith.constant 0 : index
    %c0_13 = arith.constant 0 : index
    %32 = vector.load %arg4[%c0_11, %c0_12, %c0_13] : memref<1x8x128xf32, #tpu.memory_space<vmem>>, vector<1x8x128xf32>
    %33 = vector.shape_cast %32 : vector<1x8x128xf32> to vector<8x128xf32>
    %34 = vector.shape_cast %31 : vector<16x128xf32> to vector<2x8x128xf32>
    %cst_14 = arith.constant dense<0.000000e+00> : vector<8x128xf32>
    %35 = vector.multi_reduction <add>, %34, %cst_14 [0] : vector<2x8x128xf32> to vector<8x128xf32>
    %36 = arith.addf %33, %35 : vector<8x128xf32>
    %c0_15 = arith.constant 0 : index
    %c0_16 = arith.constant 0 : index
    %c0_17 = arith.constant 0 : index
    %37 = vector.load %arg4[%c0_15, %c0_16, %c0_17] : memref<1x8x128xf32, #tpu.memory_space<vmem>>, vector<1x8x128xf32>
    %38 = vector.shape_cast %37 : vector<1x8x128xf32> to vector<8x128xf32>
    %39 = vector.shape_cast %36 : vector<8x128xf32> to vector<1x8x128xf32>
    tpu.vector_store %arg4[%c0_15, %c0_16, %c0_17], %39 {strides = array<i32>} : memref<1x8x128xf32, #tpu.memory_space<vmem>>, vector<1x8x128xf32>,
    return
  }
  func.func @transform_0(%arg0: i32, %arg1: i32) -> (i32, i32) {
    %c1_i32 = arith.constant 1 : i32
    %0 = arith.muli %arg0, %c1_i32 : i32
    %1 = arith.addi %0, %arg1 : i32
    %c0_i32 = arith.constant 0 : i32
    %c0_i32_0 = arith.constant 0 : i32
    return %1, %c0_i32 : i32, i32
  }
  func.func @transform_1(%arg0: i32, %arg1: i32) -> (i32, i32) {
    %c1_i32 = arith.constant 1 : i32
    %0 = arith.muli %arg0, %c1_i32 : i32
    %1 = arith.addi %0, %arg1 : i32
    %c0_i32 = arith.constant 0 : i32
    %c0_i32_0 = arith.constant 0 : i32
    return %1, %c0_i32 : i32, i32
  }
  func.func @transform_2(%arg0: i32, %arg1: i32) -> (i32, i32, i32) {
    %c0_i32 = arith.constant 0 : i32
    %c0_i32_0 = arith.constant 0 : i32
    %c0_i32_1 = arith.constant 0 : i32
    return %arg0, %c0_i32, %c0_i32_0 : i32, i32, i32
  }
}

</mosaic_0001>

<llo_original>
// kernel: tpu_custom_call.1
$region0: #{tpu_custom_call.1}
  #allocation0 [shape = 'u32[]', space=smem, size = 0x4, offset = 0x4, fixed_abs, tag = 'smem constant byte address 0x4 - core index']
  #allocation1 [shape = 'u32[72,128]{1,0:T(1,128)}', space=vmem, size = 0x9000, scoped, tag = 'internal scratch']
  %s0 = inlined_call_operand.hbm [shape: f32[16,128], index: 0, kind: input, shape index: {}]
  %s1 = inlined_call_operand.hbm [shape: f32[16,128], index: 1, kind: input, shape index: {}]
  %s2 = inlined_call_operand.hbm [shape: f32[1,8,128], index: 2, kind: output, shape index: {}]
  %s3 = sld [smem:[#allocation0]]
  $region30: #{tpu_custom_call.1} parent=0
    _
  %s5 = ssub.s32 1, %s3
  %s6 = scalar_select 0, %s5, %s3
  $region1: #{tpu_custom_call.1} parent=0
    #allocation2 [shape = 'u8[8192]{0}', space=vmem, size = 0x2000, scoped, tag = 'input window, operand 0, single buffered']
    #allocation3 [shape = 's32[1]{0}', space=sflag, size = 0x4, scoped, tag = 'scoped memory for tpu_custom_call.1']
    #allocation4 [shape = 's32[1]{0}', space=sflag, size = 0x4, scoped, tag = 'scoped memory for tpu_custom_call.1']
    #allocation5 [shape = 'u8[8192]{0}', space=vmem, size = 0x2000, scoped, tag = 'input window, operand 1, single buffered']
    #allocation6 [shape = 's32[1]{0}', space=sflag, size = 0x4, scoped, tag = 'scoped memory for tpu_custom_call.1']
    #allocation7 [shape = 'u8[4096]{0}', space=vmem, size = 0x1000, scoped, tag = 'output window, operand 0, single buffered']
    %7 = vsyncpa [#allocation3], 0
    %8 = vsyncpa [#allocation6], 0
    %9 = vsyncpa [#allocation4], 0
    // Predicated region
    $region2: #{tpu_custom_call.1} parent=1 // pred_check
      _
    $region3: #{tpu_custom_call.1} parent=1 // pred_check_branch
      %11 = sbr.rel (0) target = $region5
    $region4: #{tpu_custom_call.1} parent=1 // pred_region
      %s12 = sadd.s32 0, 0
      %s13 = smul.u32 2, %s12
      %15 = vsyncadd [#allocation3], 0
      %s16 = smul.addr %s13, 8
      %s17 = scalar_lea.hbm %s0, %s16
      %s18 = sshll.u32 %s17, 4
      %s19 = int_to_ptr.hbm [resolvable:$true] %s18
      %s20 = sshll.u32 [#allocation2], 4
      %s21 = int_to_ptr.vmem [resolvable:$true] %s20
      %26 = dma.hbm_to_vmem [thread:$0]  %s19, 256, %s21, [#allocation3], 128, 128, 8
    $region5: #{tpu_custom_call.1} parent=1 // pred_fallthru
      _
    // Predicated region
    $region6: #{tpu_custom_call.1} parent=1 // pred_check
      _
    $region7: #{tpu_custom_call.1} parent=1 // pred_check_branch
      %28 = sbr.rel (0) target = $region9
    $region8: #{tpu_custom_call.1} parent=1 // pred_region
      %s29 = sadd.s32 0, 0
      %s30 = smul.u32 2, %s29
      %32 = vsyncadd [#allocation6], 0
      %s33 = smul.addr %s30, 8
      %s34 = scalar_lea.hbm %s1, %s33
      %s35 = sshll.u32 %s34, 4
      %s36 = int_to_ptr.hbm [resolvable:$true] %s35
      %s37 = sshll.u32 [#allocation5], 4
      %s38 = int_to_ptr.vmem [resolvable:$true] %s37
      %43 = dma.hbm_to_vmem [thread:$0]  %s36, 256, %s38, [#allocation6], 128, 128, 8
    $region9: #{tpu_custom_call.1} parent=1 // pred_fallthru
      _
    // Predicated region
    $region10: #{tpu_custom_call.1} parent=1 // pred_check
      _
    $region11: #{tpu_custom_call.1} parent=1 // pred_check_branch
      %45 = sbr.rel (0) target = $region13
    $region12: #{tpu_custom_call.1} parent=1 // pred_region
      %47 = dma.done [#allocation3], 256
    $region13: #{tpu_custom_call.1} parent=1 // pred_fallthru
      _
    // Predicated region
    $region14: #{tpu_custom_call.1} parent=1 // pred_check
      _
    $region15: #{tpu_custom_call.1} parent=1 // pred_check_branch
      %49 = sbr.rel (0) target = $region17
    $region16: #{tpu_custom_call.1} parent=1 // pred_region
      %51 = dma.done [#allocation6], 256
    $region17: #{tpu_custom_call.1} parent=1 // pred_fallthru
      _
    %s52 = sadd.s32 0, 0
    %s53 = smul.u32 2, %s52
    %s54 = sadd.s32 0, 0
    %s55 = smul.u32 2, %s54
    %p56 = scmp.eq.s32.totalorder 0, 0
    // Predicated region
    $region18: #{tpu_custom_call.1} parent=1 // pred_check
      %p57 = pneg %p56
    $region19: #{tpu_custom_call.1} parent=1 // pred_check_branch
      %59 = sbr.rel (%p57) target = $region21
    $region20: #{tpu_custom_call.1} parent=1 // pred_region
      %60 = vst [vmem:[#allocation7] sm:$0xff] 0.0
    $region21: #{tpu_custom_call.1} parent=1 // pred_fallthru
      _
    %v61 = vld [vmem:[#allocation2] sm:$0xff]
    %v62 = vld [vmem:[#allocation2 + $0x8] sm:$0xff]
    %v63 = vld [vmem:[#allocation5] sm:$0xff]
    %v64 = vld [vmem:[#allocation5 + $0x8] sm:$0xff]
    %v65 = vand.u32 2147483647, %v61
    %v66 = vand.u32 2147483647, %v62
    %v67 = vsub.f32 0.0, %v65
    %v68 = vsub.f32 0.0, %v66
    %v69 = vmul.f32 %v67, 1.442695
    %v70 = vpow.pop %v69
    %v71 = vmul.f32 %v68, 1.442695
    %v72 = vpow.pop %v71
    %v73 = vmax.f32 %v61, 0.0
    %v74 = vmax.f32 %v62, 0.0
    %v75 = vmul.f32 %v61, %v63
    %v76 = vmul.f32 %v62, %v64
    %v77 = vsub.f32 %v73, %v75
    %v78 = vsub.f32 %v74, %v76
    %v79 = vadd.f32 %v70, 1.0
    %v80 = vlog2.pop %v79
    %v81 = vmul.f32 %v80, 0.6931472
    %v82 = vmul.f32 -0.5, %v70
    %v83 = vadd.f32 %v82, 1.0
    %v84 = vmul.f32 %v83, %v70
    %v85 = vand.u32 2147483647, %v70
    %vm86 = vcmp.lt.f32.partialorder %v85, 0.0004427343
    %v87 = vsel %vm86, %v84, %v81
    %v88 = vadd.f32 %v72, 1.0
    %v89 = vlog2.pop %v88
    %v90 = vmul.f32 %v89, 0.6931472
    %v91 = vmul.f32 -0.5, %v72
    %v92 = vadd.f32 %v91, 1.0
    %v93 = vmul.f32 %v92, %v72
    %v94 = vand.u32 2147483647, %v72
    %vm95 = vcmp.lt.f32.partialorder %v94, 0.0004427343
    %v96 = vsel %vm95, %v93, %v90
    %v97 = vadd.f32 %v77, %v87
    %v98 = vadd.f32 %v78, %v96
    %vm99 = vcmp.ge.f32.partialorder %v61, 0.0
    %vm100 = vcmp.ge.f32.partialorder %v62, 0.0
    %v101 = vsel %vm99, 1.0, %v70
    %v102 = vsel %vm100, 1.0, %v72
    %v103 = vadd.f32 %v70, 1.0
    %v104 = vadd.f32 %v72, 1.0
    %v105 = vrcp.pop %v103
    %v106 = vmul.f32 %v103, %v105
    %v107 = vsub.f32 1.0, %v106
    %v108 = vmul.f32 %v105, %v107
    %v109 = vadd.f32 %v105, %v108
    %vm110 = vweird.f32 %v103
    %vm111 = vweird.f32 %v105
    %vm112 = vmor %vm110, %vm111
    %v113 = vsel %vm112, %v105, %v109
    %v114 = vand.u32 2147483647, %v103
    %vm115 = vcmp.eq.f32.partialorder %v114, 8.507059e+37
    %v116 = vand.u32 %v103, 2147483648
    %v117 = vor.u32 1.1754944e-38, %v116
    %v118 = vsel %vm115, %v117, %v113
    %v119 = vrcp.pop %v104
    %v120 = vmul.f32 %v104, %v119
    %v121 = vsub.f32 1.0, %v120
    %v122 = vmul.f32 %v119, %v121
    %v123 = vadd.f32 %v119, %v122
    %vm124 = vweird.f32 %v104
    %vm125 = vweird.f32 %v119
    %vm126 = vmor %vm124, %vm125
    %v127 = vsel %vm126, %v119, %v123
    %v128 = vand.u32 2147483647, %v104
    %vm129 = vcmp.eq.f32.partialorder %v128, 8.507059e+37
    %v130 = vand.u32 %v104, 2147483648
    %v131 = vor.u32 1.1754944e-38, %v130
    %v132 = vsel %vm129, %v131, %v127
    %v133 = vmul.f32 %v101, %v118
    %v134 = vmul.f32 %v102, %v132
    %v135 = vsub.f32 %v133, %v63
    %v136 = vsub.f32 %v134, %v64
    %v137 = vsub.f32 %v135, 1.0
    %v138 = vsub.f32 %v136, 1.0
    %v139 = vmul.f32 %v137, 19.96008
    %v140 = vmul.f32 %v138, 19.96008
    %v141 = vmul.f32 %v139, 1.442695
    %v142 = vpow.pop %v141
    %v143 = vmul.f32 %v140, 1.442695
    %v144 = vpow.pop %v143
    %v145 = vsub.f32 1.0, %v142
    %v146 = vsub.f32 1.0, %v144
    %v147 = vmul.f32 %v97, %v145
    %v148 = vmul.f32 %v98, %v146
    %v149 = vld [vmem:[#allocation7] sm:$0xff]
    %v150 = vadd.f32 %v147, %v148
    %v151 = vadd.f32 %v149, %v150
    %152 = vst [vmem:[#allocation7] sm:$0xff] %v151
    // Predicated region
    $region22: #{tpu_custom_call.1} parent=1 // pred_check
      _
    $region23: #{tpu_custom_call.1} parent=1 // pred_check_branch
      %154 = sbr.rel (0) target = $region25
    $region24: #{tpu_custom_call.1} parent=1 // pred_region
      %156 = vsyncadd [#allocation4], 0
      %s158 = sshll.u32 [#allocation7], 4
      %s159 = int_to_ptr.vmem [resolvable:$true] %s158
      %s160 = sshll.u32 %s2, 4
      %s161 = int_to_ptr.hbm [resolvable:$true] %s160
      %163 = dma.vmem_to_hbm [thread:$0]  %s159, 128, %s161, [#allocation4]
    $region25: #{tpu_custom_call.1} parent=1 // pred_fallthru
      _
    // Predicated region
    $region26: #{tpu_custom_call.1} parent=1 // pred_check
      _
    $region27: #{tpu_custom_call.1} parent=1 // pred_check_branch
      %165 = sbr.rel (0) target = $region29
    $region28: #{tpu_custom_call.1} parent=1 // pred_region
      %167 = dma.done [#allocation4], 128
    $region29: #{tpu_custom_call.1} parent=1 // pred_fallthru
      _
    %168 = vsyncpa [#allocation3], 1
    %169 = vsyncpa [#allocation6], 1
    %170 = vsyncpa [#allocation4], 1

</llo_original>
